<compile_context>
chip_gen: v5e
topology: v5e:2x2
jax: 0.10.0
libtpu: 0.0.40
codegen_flags: <defaults>
</compile_context>

<pallas_src>
import math

import jax
import jax.numpy as jnp
from jax.experimental import pallas as pl
from jax.experimental.pallas import tpu as pltpu


def _round_up(x, m):
    return ((x + m - 1) // m) * m


def classifier_kernel(x_ref, w1_ref, b1_ref, w2_ref, b2_ref, o_ref):
    # x_ref:  (tm, in_size)      f32  (cast to bf16 here)
    # w1_ref: (in_size, hid_p)   bf16    b1_ref: (1, hid_p)    f32
    # w2_ref: (hid_p, n_labels)  bf16    b2_ref: (1, n_labels) f32
    # o_ref:  (tm, n_labels)     f32
    x = x_ref[...].astype(jnp.bfloat16)
    h = jnp.dot(x, w1_ref[...], preferred_element_type=jnp.float32)
    h = h + b1_ref[...]
    # LeakyReLU with PyTorch default negative_slope = 0.01 (f32)
    h = jnp.maximum(h, 0.01 * h)
    out = jnp.dot(h.astype(jnp.bfloat16), w2_ref[...],
                  preferred_element_type=jnp.float32)
    out = out + b2_ref[...]
    o_ref[...] = out.astype(o_ref.dtype)


def prepare_classifier_params(w1, b1, w2, b2):
    """One-time (init-time) padding + casting of the parameters.

    w1: (input_size, hidden)   b1: (1, hidden) or (hidden,)
    w2: (hidden, n_labels)     b2: (1, n_labels) or (n_labels,)

    Pads only the hidden dim to a multiple of 128 (lane-dense intermediate) and
    casts the weights to bf16 (MXU-native). Call once and reuse; do NOT call
    per forward.
    """
    in_size, hidden = w1.shape
    n_labels = w2.shape[1]
    hid_p = _round_up(hidden, 128)

    w1_p = jnp.zeros((in_size, hid_p), jnp.bfloat16).at[:, :hidden].set(
        w1.astype(jnp.bfloat16))
    b1_p = jnp.zeros((1, hid_p), jnp.float32).at[:, :hidden].set(
        jnp.asarray(b1, jnp.float32).reshape(1, hidden))
    w2_p = jnp.zeros((hid_p, n_labels), jnp.bfloat16).at[:hidden, :].set(
        w2.astype(jnp.bfloat16))
    b2_p = jnp.asarray(b2, jnp.float32).reshape(1, n_labels)
    return w1_p, b1_p, w2_p, b2_p


def classifier_forward(x, w1_p, b1_p, w2_p, b2_p, *, tm=None,
                       out_dtype=jnp.float32):
    """x: (B, input_size) f32; padded params from prepare_classifier_params.
    Returns (B, n_labels) in out_dtype (set out_dtype=jnp.bfloat16 to halve the
    output writeback if downstream consumers tolerate bf16 logits)."""
    B, in_size = x.shape
    hid_p = w1_p.shape[1]
    n_labels = w2_p.shape[1]

    if tm is None:
        if B <= 512:
            # Single grid step: the grid is a serial loop on single-TC
            # v5e/v6e, and the v7x megacore split only pays off once each
            # half gets >= ~128-256 rows.  tm == B keeps the block equal to
            # the full batch dim (always a legal block shape, no padding).
            tm = B
        else:
            # Large batch: 256-row tiles (multiple of 16 for bf16 sublane
            # packing, well-filled MXU passes); the "parallel" grid axis lets
            # the v7x megacore shard the steps.  Partial last block is fine:
            # OOB rows read garbage, their output writes are dropped.
            tm = 256

    grid = (pl.cdiv(B, tm),)

    flops = 2 * B * (in_size * hid_p + hid_p * n_labels)
    bytes_accessed = (
        B * in_size * x.dtype.itemsize
        + w1_p.size * 2 + b1_p.size * 4
        + w2_p.size * 2 + b2_p.size * 4
        + B * n_labels * jnp.dtype(out_dtype).itemsize)
    cost = pl.CostEstimate(flops=flops, transcendentals=0,
                           bytes_accessed=bytes_accessed)

    # TODO(synk): if input_size/hidden ever grow so resident bf16 weights
    # approach VMEM (budget against v7x's 64 MiB physical / 32 MiB default
    # scoped limit), first pin the constant-index W1/W2 specs with
    # pipeline_mode=pl.Buffered(1) + an explicit vmem_limit_bytes; only then
    # add a K-reduction ("arbitrary") grid axis with a VMEM accumulator.
    return pl.pallas_call(
        classifier_kernel,
        out_shape=jax.ShapeDtypeStruct((B, n_labels), out_dtype),
        grid_spec=pltpu.PrefetchScalarGridSpec(
            num_scalar_prefetch=0,
            grid=grid,
            in_specs=[
                pl.BlockSpec((tm, in_size), lambda i: (i, 0)),      # x tile
                pl.BlockSpec((in_size, hid_p), lambda i: (0, 0)),   # W1 (resident)
                pl.BlockSpec((1, hid_p), lambda i: (0, 0)),         # b1
                pl.BlockSpec((hid_p, n_labels), lambda i: (0, 0)),  # W2 (resident)
                pl.BlockSpec((1, n_labels), lambda i: (0, 0)),      # b2
            ],
            out_specs=pl.BlockSpec((tm, n_labels), lambda i: (i, 0)),
        ),
        compiler_params=pltpu.CompilerParams(
            dimension_semantics=("parallel",),
        ),
        cost_estimate=cost,
    )(x, w1_p, b1_p, w2_p, b2_p)


def xavier_uniform(key, fan_in, fan_out):
    # matches nn.init.xavier_uniform_ (gain=1)
    limit = math.sqrt(6.0 / (fan_in + fan_out))
    # PyTorch weight is (fan_out, fan_in); we store the transpose (fan_in, fan_out)
    return jax.random.uniform(
        key, (fan_in, fan_out), minval=-limit, maxval=limit, dtype=jnp.float32
    )


def linear_bias_init(key, fan_in, fan_out):
    # PyTorch nn.Linear default bias init: U(-1/sqrt(fan_in), 1/sqrt(fan_in))
    bound = 1.0 / math.sqrt(fan_in)
    return jax.random.uniform(
        key, (1, fan_out), minval=-bound, maxval=bound, dtype=jnp.float32
    )


if __name__ == "__main__":
    # Small shapes consistent with the module
    batch = 16
    input_size = 32
    hidden_size = 64
    n_labels = 48

    key = jax.random.PRNGKey(0)
    k_x, k_w1, k_b1, k_w2, k_b2 = jax.random.split(key, 5)

    x = jax.random.normal(k_x, (batch, input_size), dtype=jnp.float32)
    w1 = xavier_uniform(k_w1, input_size, hidden_size)
    b1 = linear_bias_init(k_b1, input_size, hidden_size)
    w2 = xavier_uniform(k_w2, hidden_size, n_labels)
    b2 = linear_bias_init(k_b2, hidden_size, n_labels)

    # One-time parameter prep (padding + bf16 cast hoisted out of the forward).
    params = prepare_classifier_params(w1, b1, w2, b2)

    fwd = jax.jit(classifier_forward)
    out = fwd(x, *params)
    out = jax.block_until_ready(out)

    # Reference check in plain JAX (same math as the PyTorch forward), f32.
    # Tolerance loosened because the kernel uses bf16 matmul inputs with f32 accumulation.
    h_ref = x @ w1 + b1
    h_ref = jnp.where(h_ref > 0, h_ref, 0.01 * h_ref)
    ref = h_ref @ w2 + b2
    assert out.shape == (batch, n_labels)
    assert jnp.allclose(out, ref, atol=3e-2, rtol=3e-2)

    print("KERNEL_OK")
</pallas_src>

<mosaic_0001>
module attributes {stable_mosaic.version = 11 : i64} {
  func.func @classifier_kernel(%arg0: i32, %arg1: memref<16x32xf32, #tpu.memory_space<vmem>>, %arg2: memref<32x128xbf16, #tpu.memory_space<vmem>>, %arg3: memref<1x128xf32, #tpu.memory_space<vmem>>, %arg4: memref<128x48xbf16, #tpu.memory_space<vmem>>, %arg5: memref<1x48xf32, #tpu.memory_space<vmem>>, %arg6: memref<16x48xf32, #tpu.memory_space<vmem>>) attributes {dimension_semantics = [#tpu.dimension_semantics<parallel>], iteration_bounds = array<i64: 1>, scalar_prefetch = 0 : i64, scratch_operands = 0 : i64, tpu.core_type = #tpu.core_type<tc>, window_params = [{transform_indices = @transform_0, window_bounds = array<i64: 16, 32>}, {pipeline_mode = #tpu.pipeline_mode<synchronous>, transform_indices = @transform_1, window_bounds = array<i64: 32, 128>}, {pipeline_mode = #tpu.pipeline_mode<synchronous>, transform_indices = @transform_2, window_bounds = array<i64: 1, 128>}, {pipeline_mode = #tpu.pipeline_mode<synchronous>, transform_indices = @transform_3, window_bounds = array<i64: 128, 48>}, {pipeline_mode = #tpu.pipeline_mode<synchronous>, transform_indices = @transform_4, window_bounds = array<i64: 1, 48>}, {transform_indices = @transform_5, window_bounds = array<i64: 16, 48>}]} {
    %c0 = arith.constant 0 : index
    %c0_0 = arith.constant 0 : index
    %0 = vector.load %arg1[%c0, %c0_0] : memref<16x32xf32, #tpu.memory_space<vmem>>, vector<16x32xf32>
    %1 = arith.truncf %0 : vector<16x32xf32> to vector<16x32xbf16>
    %c0_1 = arith.constant 0 : index
    %c0_2 = arith.constant 0 : index
    %2 = vector.load %arg2[%c0_1, %c0_2] : memref<32x128xbf16, #tpu.memory_space<vmem>>, vector<32x128xbf16>
    %cst = arith.constant dense<0.000000e+00> : vector<16x128xf32>
    %3 = tpu.matmul %1, %2, %cst {dimension_numbers = #tpu.dot_dimension_numbers<[1], [0], [0], [1], [0, 0, 1, 1], [], []>} : vector<16x32xbf16>, vector<32x128xbf16>, vector<16x128xf32> -> vector<16x128xf32>
    %c0_3 = arith.constant 0 : index
    %c0_4 = arith.constant 0 : index
    %4 = vector.load %arg3[%c0_3, %c0_4] : memref<1x128xf32, #tpu.memory_space<vmem>>, vector<1x128xf32>
    %5 = vector.broadcast %4 : vector<1x128xf32> to vector<16x128xf32>
    %6 = arith.addf %3, %5 : vector<16x128xf32>
    %cst_5 = arith.constant 0.00999999977 : f32
    %7 = vector.broadcast %cst_5 : f32 to vector<16x128xf32>
    %8 = arith.mulf %7, %6 : vector<16x128xf32>
    %9 = arith.maximumf %6, %8 : vector<16x128xf32>
    %10 = arith.truncf %9 : vector<16x128xf32> to vector<16x128xbf16>
    %c0_6 = arith.constant 0 : index
    %c0_7 = arith.constant 0 : index
    %11 = vector.load %arg4[%c0_6, %c0_7] : memref<128x48xbf16, #tpu.memory_space<vmem>>, vector<128x48xbf16>
    %cst_8 = arith.constant dense<0.000000e+00> : vector<16x48xf32>
    %12 = tpu.matmul %10, %11, %cst_8 {dimension_numbers = #tpu.dot_dimension_numbers<[1], [0], [0], [1], [0, 0, 1, 1], [], []>} : vector<16x128xbf16>, vector<128x48xbf16>, vector<16x48xf32> -> vector<16x48xf32>
    %c0_9 = arith.constant 0 : index
    %c0_10 = arith.constant 0 : index
    %13 = vector.load %arg5[%c0_9, %c0_10] : memref<1x48xf32, #tpu.memory_space<vmem>>, vector<1x48xf32>
    %14 = vector.broadcast %13 : vector<1x48xf32> to vector<16x48xf32>
    %15 = arith.addf %12, %14 : vector<16x48xf32>
    %c0_11 = arith.constant 0 : index
    %c0_12 = arith.constant 0 : index
    %16 = vector.load %arg6[%c0_11, %c0_12] : memref<16x48xf32, #tpu.memory_space<vmem>>, vector<16x48xf32>
    tpu.vector_store %arg6[%c0_11, %c0_12], %15 {strides = array<i32>} : memref<16x48xf32, #tpu.memory_space<vmem>>, vector<16x48xf32>,
    return
  }
  func.func @transform_0(%arg0: i32) -> (i32, i32) {
    %c0_i32 = arith.constant 0 : i32
    %c0_i32_0 = arith.constant 0 : i32
    return %arg0, %c0_i32 : i32, i32
  }
  func.func @transform_1(%arg0: i32) -> (i32, i32) {
    %c0_i32 = arith.constant 0 : i32
    %c0_i32_0 = arith.constant 0 : i32
    %c0_i32_1 = arith.constant 0 : i32
    return %c0_i32, %c0_i32_0 : i32, i32
  }
  func.func @transform_2(%arg0: i32) -> (i32, i32) {
    %c0_i32 = arith.constant 0 : i32
    %c0_i32_0 = arith.constant 0 : i32
    %c0_i32_1 = arith.constant 0 : i32
    return %c0_i32, %c0_i32_0 : i32, i32
  }
  func.func @transform_3(%arg0: i32) -> (i32, i32) {
    %c0_i32 = arith.constant 0 : i32
    %c0_i32_0 = arith.constant 0 : i32
    %c0_i32_1 = arith.constant 0 : i32
    return %c0_i32, %c0_i32_0 : i32, i32
  }
  func.func @transform_4(%arg0: i32) -> (i32, i32) {
    %c0_i32 = arith.constant 0 : i32
    %c0_i32_0 = arith.constant 0 : i32
    %c0_i32_1 = arith.constant 0 : i32
    return %c0_i32, %c0_i32_0 : i32, i32
  }
  func.func @transform_5(%arg0: i32) -> (i32, i32) {
    %c0_i32 = arith.constant 0 : i32
    %c0_i32_0 = arith.constant 0 : i32
    return %arg0, %c0_i32 : i32, i32
  }
}

</mosaic_0001>

<llo_original>
// kernel: classifier_forward.1
$region0: #{classifier_forward.1}
  #allocation0 [shape = 'u32[]', space=smem, size = 0x4, offset = 0x4, fixed_abs, tag = 'smem constant byte address 0x4 - core index']
  #allocation1 [shape = 'u32[72,128]{1,0:T(1,128)}', space=vmem, size = 0x9000, scoped, tag = 'internal scratch']
  %s0 = inlined_call_operand.vmem [shape: f32[16,32], index: 0, kind: input, shape index: {}]
  %s1 = inlined_call_operand.vmem [shape: bf16[32,128], index: 1, kind: input, shape index: {}]
  %s2 = inlined_call_operand.vmem [shape: f32[1,128], index: 2, kind: input, shape index: {}]
  %s3 = inlined_call_operand.vmem [shape: bf16[128,48], index: 3, kind: input, shape index: {}]
  %s4 = inlined_call_operand.vmem [shape: f32[1,48], index: 4, kind: input, shape index: {}]
  %s5 = inlined_call_operand.hbm [shape: f32[16,48], index: 5, kind: output, shape index: {}]
  %s6 = sld [smem:[#allocation0]]
  $region30: #{classifier_forward.1} parent=0
    _
  %s8 = ssub.s32 1, %s6
  %s9 = scalar_select 0, %s8, %s6
  $region1: #{classifier_forward.1} parent=0
    #allocation2 [shape = 'u8[8192]{0}', space=vmem, size = 0x2000, scoped, tag = 'output window, operand 0, single buffered']
    #allocation3 [shape = 's32[1]{0}', space=sflag, size = 0x4, scoped, tag = 'scoped memory for classifier_forward.1']
    %10 = vsyncpa [#allocation3], 0
    // Predicated region
    $region2: #{classifier_forward.1} parent=1 // pred_check
      _
    $region3: #{classifier_forward.1} parent=1 // pred_check_branch
      %12 = sbr.rel (0) target = $region5
    $region4: #{classifier_forward.1} parent=1 // pred_region
      _
    $region5: #{classifier_forward.1} parent=1 // pred_fallthru
      _
    // Predicated region
    $region6: #{classifier_forward.1} parent=1 // pred_check
      _
    $region7: #{classifier_forward.1} parent=1 // pred_check_branch
      %14 = sbr.rel (0) target = $region9
    $region8: #{classifier_forward.1} parent=1 // pred_region
      _
    $region9: #{classifier_forward.1} parent=1 // pred_fallthru
      _
    // Predicated region
    $region10: #{classifier_forward.1} parent=1 // pred_check
      _
    $region11: #{classifier_forward.1} parent=1 // pred_check_branch
      %16 = sbr.rel (0) target = $region13
    $region12: #{classifier_forward.1} parent=1 // pred_region
      _
    $region13: #{classifier_forward.1} parent=1 // pred_fallthru
      _
    // Predicated region
    $region14: #{classifier_forward.1} parent=1 // pred_check
      _
    $region15: #{classifier_forward.1} parent=1 // pred_check_branch
      %18 = sbr.rel (0) target = $region17
    $region16: #{classifier_forward.1} parent=1 // pred_region
      _
    $region17: #{classifier_forward.1} parent=1 // pred_fallthru
      _
    // Predicated region
    $region18: #{classifier_forward.1} parent=1 // pred_check
      _
    $region19: #{classifier_forward.1} parent=1 // pred_check_branch
      %20 = sbr.rel (0) target = $region21
    $region20: #{classifier_forward.1} parent=1 // pred_region
      _
    $region21: #{classifier_forward.1} parent=1 // pred_fallthru
      _
    %v22 = vld [vmem:[%s0] sm:$0xff]
    %v23 = vld [vmem:[%s0 + $0x8] sm:$0xff]
    %v24 = vpack.c.bf16 %v23, %v22
    %v25 = vld [vmem:[%s1] sm:$0xf]
    %v26 = vld [vmem:[%s1 + $0x4] sm:$0xf]
    %v27 = vld [vmem:[%s1 + $0x8] sm:$0xf]
    %v28 = vld [vmem:[%s1 + $0xc] sm:$0xf]
    %v29 = vld [vmem:[%s2] sm:$0x1]
    %v31 = vperm.slane %v29, 0
    %v37 = vunpack.c.l.b16 %v25
    %v38 = vunpack.c.l.b16 %v26
    %v39 = vunpack.c.l.b16 %v27
    %v40 = vunpack.c.l.b16 %v28
    %v41 = vpack.c.b16 %v38, %v37
    %v42 = vpack.c.b16 %v40, %v39
    %vm45 = vcmask 261120
    %v47 = vsel %vm45, %v24, 0
    %49 = vmatpush.bf16.msra.mxu0 0
    %50 = vmatpush.bf16.msra.mxu0 0
    %51 = vmatpush.bf16.msra.mxu0 0
    %52 = vmatpush.bf16.msra.mxu0 0
    %53 = vmatpush.bf16.msra.mxu0 0
    %54 = vmatpush.bf16.msra.mxu0 0
    %55 = vmatpush.bf16.msra.mxu0 %v42
    %56 = vmatpush.bf16.msra.mxu0 %v41
    %57 = vmatmul.bf16.gmra.mxu0 %v47
    %v58 = vpop.f32.mrf.mxu0
    %v59 = vadd.f32 %v31, %v58
    %v60 = vpop.f32.mrf.mxu0
    %v61 = vadd.f32 %v31, %v60
    %62 = vdwg.mxu0
    %v63 = vmul.f32 %v59, 0.01
    %v64 = vmul.f32 %v61, 0.01
    %v65 = vmax.f32 %v59, %v63
    %v66 = vmax.f32 %v61, %v64
    %v67 = vpack.c.bf16 %v66, %v65
    %v68 = vld [vmem:[%s3] sm:$0xf]
    %v69 = vld [vmem:[%s3 + $0x4] sm:$0xf]
    %v70 = vld [vmem:[%s3 + $0x8] sm:$0xf]
    %v71 = vld [vmem:[%s3 + $0xc] sm:$0xf]
    %v72 = vld [vmem:[%s3 + $0x10] sm:$0xf]
    %v73 = vld [vmem:[%s3 + $0x14] sm:$0xf]
    %v74 = vld [vmem:[%s3 + $0x18] sm:$0xf]
    %v75 = vld [vmem:[%s3 + $0x1c] sm:$0xf]
    %v76 = vld [vmem:[%s3 + $0x20] sm:$0xf]
    %v77 = vld [vmem:[%s3 + $0x24] sm:$0xf]
    %v78 = vld [vmem:[%s3 + $0x28] sm:$0xf]
    %v79 = vld [vmem:[%s3 + $0x2c] sm:$0xf]
    %v80 = vld [vmem:[%s3 + $0x30] sm:$0xf]
    %v81 = vld [vmem:[%s3 + $0x34] sm:$0xf]
    %v82 = vld [vmem:[%s3 + $0x38] sm:$0xf]
    %v83 = vld [vmem:[%s3 + $0x3c] sm:$0xf]
    %v84 = vld [vmem:[%s4] sm:$0x1]
    %v86 = vperm.slane %v84, 0
    %v104 = vunpack.c.l.b16 %v68
    %v105 = vunpack.c.l.b16 %v69
    %v106 = vunpack.c.l.b16 %v70
    %v107 = vunpack.c.l.b16 %v71
    %v108 = vunpack.c.l.b16 %v72
    %v109 = vunpack.c.l.b16 %v73
    %v110 = vunpack.c.l.b16 %v74
    %v111 = vunpack.c.l.b16 %v75
    %v112 = vunpack.c.l.b16 %v76
    %v113 = vunpack.c.l.b16 %v77
    %v114 = vunpack.c.l.b16 %v78
    %v115 = vunpack.c.l.b16 %v79
    %v116 = vunpack.c.l.b16 %v80
    %v117 = vunpack.c.l.b16 %v81
    %v118 = vunpack.c.l.b16 %v82
    %v119 = vunpack.c.l.b16 %v83
    %v120 = vpack.c.b16 %v105, %v104
    %v121 = vpack.c.b16 %v107, %v106
    %v122 = vpack.c.b16 %v109, %v108
    %v123 = vpack.c.b16 %v111, %v110
    %v124 = vpack.c.b16 %v113, %v112
    %v125 = vpack.c.b16 %v115, %v114
    %v126 = vpack.c.b16 %v117, %v116
    %v127 = vpack.c.b16 %v119, %v118
    %136 = vmatpush.bf16.msra.mxu0 %v127
    %137 = vmatpush.bf16.msra.mxu0 %v126
    %138 = vmatpush.bf16.msra.mxu0 %v125
    %139 = vmatpush.bf16.msra.mxu0 %v124
    %140 = vmatpush.bf16.msra.mxu0 %v123
    %141 = vmatpush.bf16.msra.mxu0 %v122
    %142 = vmatpush.bf16.msra.mxu0 %v121
    %143 = vmatpush.bf16.msra.mxu0 %v120
    %144 = vmatmul.bf16.gmra.mxu0 %v67
    %v145 = vpop.f32.mrf.mxu0
    %v146 = vadd.f32 %v86, %v145
    %v147 = vpop.f32.mrf.mxu0
    %v148 = vadd.f32 %v86, %v147
    %149 = vdwg.mxu0
    %vm150 = vcmask 392192
    %151 = vst.msk [vmem:[#allocation2] sm:$0xff] %vm150, %v146
    %152 = vst.msk [vmem:[#allocation2 + $0x8] sm:$0xff] %vm150, %v148
    // Predicated region
    $region22: #{classifier_forward.1} parent=1 // pred_check
      _
    $region23: #{classifier_forward.1} parent=1 // pred_check_branch
      %154 = sbr.rel (0) target = $region25
    $region24: #{classifier_forward.1} parent=1 // pred_region
      %156 = vsyncadd [#allocation3], 0
      %s157 = sshll.u32 [#allocation2], 4
      %s158 = int_to_ptr.vmem [resolvable:$true] %s157
      %s159 = sshll.u32 %s5, 4
      %s160 = int_to_ptr.hbm [resolvable:$true] %s159
      %165 = dma.vmem_to_hbm [thread:$0]  %s158, 256, %s160, [#allocation3], 128, 128, 8
    $region25: #{classifier_forward.1} parent=1 // pred_fallthru
      _
    // Predicated region
    $region26: #{classifier_forward.1} parent=1 // pred_check
      _
    $region27: #{classifier_forward.1} parent=1 // pred_check_branch
      %167 = sbr.rel (0) target = $region29
    $region28: #{classifier_forward.1} parent=1 // pred_region
      %169 = dma.done [#allocation3], 256
    $region29: #{classifier_forward.1} parent=1 // pred_fallthru
      _
    %170 = vsyncpa [#allocation3], 1

</llo_original>
